<compile_context>
chip_gen: v7x
topology: tpu7x:2x2x1
jax: 0.10.0
libtpu: 0.0.40
codegen_flags: <defaults>
</compile_context>

<pallas_src>
import functools

import jax
import jax.numpy as jnp
from jax.experimental import pallas as pl
from jax.experimental.pallas import tpu as pltpu


def _multitask_loss_kernel(alpha_ref, op_ref, oc_ref, lp_ref, ls_ref, out_ref,
                           acc_ref, *, batch, tile_b, tiles_per_core,
                           needs_mask):
    c = pl.program_id(0)          # TensorCore split index
    i = pl.program_id(1)          # batch-tile index within this core's slice
    tile_idx = c * tiles_per_core + i

    @pl.when(i == 0)
    def _():
        acc_ref[0] = jnp.float32(0.0)   # running sum of BCE inner term
        acc_ref[1] = jnp.float32(0.0)   # running sum of squared errors

    # --- BCE inner term (nn.BCELoss semantics: logs clamped at -100) ---
    p = op_ref[...].astype(jnp.float32)
    y = oc_ref[...].astype(jnp.float32)
    p = jnp.clip(p, 0.0, 1.0)           # BCELoss domain; kills padded garbage
    log_p = jnp.maximum(jnp.log(p), -100.0)
    log_1mp = jnp.maximum(jnp.log(1.0 - p), -100.0)
    # -(y*log p + (1-y)*log(1-p)) == -(log_1mp + y*(log_p - log_1mp));
    # accumulate the un-negated sum and negate once at finalize.
    bce_elem = log_1mp + y * (log_p - log_1mp)

    # --- MSE elementwise terms ---
    d = lp_ref[...].astype(jnp.float32) - ls_ref[...].astype(jnp.float32)
    mse_elem = d * d

    if needs_mask:
        # Only tiles whose row range extends past B can contain invalid rows
        # (partial tail tile or redundant clamped tiles).  Steady-state tiles
        # take the mask-free branch.
        @pl.when((tile_idx + 1) * tile_b <= batch)
        def _():
            acc_ref[0] += jnp.sum(bce_elem)
            acc_ref[1] += jnp.sum(mse_elem)

        @pl.when((tile_idx + 1) * tile_b > batch)
        def _():
            row = jax.lax.broadcasted_iota(jnp.int32, bce_elem.shape, 0)
            valid = (tile_idx * tile_b + row) < batch
            acc_ref[0] += jnp.sum(jnp.where(valid, bce_elem, 0.0))
            acc_ref[1] += jnp.sum(jnp.where(valid, mse_elem, 0.0))
    else:
        acc_ref[0] += jnp.sum(bce_elem)
        acc_ref[1] += jnp.sum(mse_elem)

    # --- finalize: normalize by global count, weight, write this core's partial
    @pl.when(i == pl.num_programs(1) - 1)
    def _():
        n = jnp.float32(batch * bce_elem.shape[-1])
        bce = -acc_ref[0] / n
        mse = acc_ref[1] / n
        partial = bce * alpha_ref[0] + mse * alpha_ref[1]
        out_ref[...] = jnp.zeros(out_ref.shape, jnp.float32) + partial


def _vmem_capacity_bytes():
    """Physical VMEM per TensorCore (generation-aware budget source)."""
    try:
        cap = int(pltpu.get_tpu_info().vmem_capacity_bytes)
        if cap > 0:
            return cap
    except Exception:
        pass
    return 64 * 1024 * 1024  # conservative fallback (v7x per-TC VMEM)


def _choose_tile(batch, feat, max_itemsize, min_itemsize, budget_bytes):
    """Largest batch tile s.t. 4 double-buffered input streams fit the budget,
    rounded to the dtype-correct sublane multiple."""
    sub = max(8, 32 // max(1, min_itemsize))      # 8 f32, 16 bf16, 32 int8/fp8
    per_row = feat * 4 * 2 * max_itemsize          # 4 streams x double buffer
    tb_max = max(sub, (budget_bytes // per_row) // sub * sub)
    if batch <= tb_max:
        return batch   # full batch in one tile (block dim == array dim is legal)
    return int(tb_max)


def multitask_loss(outcome_pred, los_pred, outcome, los, alpha, *, tile_b=None):
    """Pallas implementation of MultitaskLoss.forward.

    Args:
        outcome_pred: (B, F) probabilities in [0, 1]   (f32 or bf16)
        los_pred:     (B, F) regression predictions
        outcome:      (B, F) binary targets
        los:          (B, F) regression targets
        alpha:        (2,)   task weights
        tile_b:       optional batch-tile override (mostly for testing)
    Returns:
        scalar f32 loss
    """
    B, F = outcome_pred.shape
    itemsizes = [jnp.dtype(x.dtype).itemsize
                 for x in (outcome_pred, outcome, los_pred, los)]
    max_item, min_item = max(itemsizes), min(itemsizes)

    vmem_cap = _vmem_capacity_bytes()
    input_budget = vmem_cap // 2
    if tile_b is None:
        tile_b = _choose_tile(B, F, max_item, min_item, input_budget)

    total_tiles = pl.cdiv(B, tile_b)
    # Dual-TensorCore split (v7x); serial (and harmless) on 1-TC chips.
    num_splits = 2 if total_tiles >= 2 else 1
    tiles_per_core = pl.cdiv(total_tiles, num_splits)
    covered_tiles = num_splits * tiles_per_core
    needs_clamp = covered_tiles > total_tiles
    needs_mask = covered_tiles * tile_b != B

    def tile_map(c, i):
        t = c * tiles_per_core + i
        if needs_clamp:
            t = jnp.minimum(t, total_tiles - 1)   # redundant tiles re-read last
        return (t, 0)

    kernel = functools.partial(
        _multitask_loss_kernel, batch=B, tile_b=tile_b,
        tiles_per_core=tiles_per_core, needs_mask=needs_mask)

    input_bytes = 4 * 2 * tile_b * F * max_item
    vmem_limit = max(32 * 1024 * 1024,
                     min(vmem_cap, input_bytes + 16 * 1024 * 1024))

    out = pl.pallas_call(
        kernel,
        out_shape=jax.ShapeDtypeStruct((num_splits * 8, 128), jnp.float32),
        grid=(num_splits, tiles_per_core),
        in_specs=[
            pl.BlockSpec(memory_space=pltpu.MemorySpace.SMEM),  # alpha (2,)
            pl.BlockSpec((tile_b, F), tile_map),                # outcome_pred
            pl.BlockSpec((tile_b, F), tile_map),                # outcome
            pl.BlockSpec((tile_b, F), tile_map),                # los_pred
            pl.BlockSpec((tile_b, F), tile_map),                # los
        ],
        out_specs=pl.BlockSpec((8, 128), lambda c, i: (c, 0)),  # per-core block
        scratch_shapes=[
            pltpu.SMEM((2,), jnp.float32),                      # bce/mse sums
        ],
        compiler_params=pltpu.CompilerParams(
            dimension_semantics=("parallel", "arbitrary"),
            vmem_limit_bytes=int(vmem_limit),
        ),
    )(alpha.astype(jnp.float32), outcome_pred, outcome, los_pred, los)

    # Each core's alpha-weighted partial sits at row c*8; sum them.
    return jnp.sum(out[::8, 0])


def _reference_loss(outcome_pred, los_pred, outcome, los, alpha):
    bce = jnp.mean(
        -(outcome * jnp.maximum(jnp.log(outcome_pred), -100.0)
          + (1.0 - outcome) * jnp.maximum(jnp.log(1.0 - outcome_pred), -100.0)))
    mse = jnp.mean((los_pred - los) ** 2)
    return bce * alpha[0] + mse * alpha[1]


if __name__ == "__main__":
    key = jax.random.PRNGKey(0)

    # ---- case 1: small demo shape, single tile, no mask path ----
    B, F = 8, 128
    k1, k2, k3, k4, key = jax.random.split(key, 5)
    outcome_pred = jax.nn.sigmoid(jax.random.normal(k1, (B, F), dtype=jnp.float32))
    outcome = (jax.random.uniform(k2, (B, F)) > 0.5).astype(jnp.float32)
    los_pred = jax.random.normal(k3, (B, F), dtype=jnp.float32) * 2.0 + 5.0
    los = jax.random.normal(k4, (B, F), dtype=jnp.float32) * 2.0 + 5.0
    alpha = jnp.ones((2,), dtype=jnp.float32)  # nn.Parameter(torch.ones(2))

    loss = multitask_loss(outcome_pred, los_pred, outcome, los, alpha)
    jax.block_until_ready(loss)
    ref = _reference_loss(outcome_pred, los_pred, outcome, los, alpha)
    assert jnp.allclose(loss, ref, rtol=1e-5, atol=1e-5), (loss, ref)

    # ---- case 2: multi-tile, dual-core split, partial tail + clamped tile ----
    B2, F2, TB2 = 20, 128, 8   # 3 valid tiles -> 2 cores x 2 steps, tail masked
    k1, k2, k3, k4, key = jax.random.split(key, 5)
    op2 = jax.nn.sigmoid(jax.random.normal(k1, (B2, F2), dtype=jnp.float32))
    oc2 = (jax.random.uniform(k2, (B2, F2)) > 0.5).astype(jnp.float32)
    lp2 = jax.random.normal(k3, (B2, F2), dtype=jnp.float32) * 2.0 + 5.0
    ls2 = jax.random.normal(k4, (B2, F2), dtype=jnp.float32) * 2.0 + 5.0
    alpha2 = jnp.array([0.7, 1.3], dtype=jnp.float32)

    loss2 = multitask_loss(op2, lp2, oc2, ls2, alpha2, tile_b=TB2)
    jax.block_until_ready(loss2)
    ref2 = _reference_loss(op2, lp2, oc2, ls2, alpha2)
    assert jnp.allclose(loss2, ref2, rtol=1e-5, atol=1e-5), (loss2, ref2)

    print("KERNEL_OK")
</pallas_src>

<mosaic_0001>
module attributes {stable_mosaic.version = 11 : i64} {
  func.func @_multitask_loss_kernel(%arg0: i32, %arg1: i32, %arg2: memref<2xf32, #tpu.memory_space<smem>>, %arg3: memref<8x128xf32, #tpu.memory_space<vmem>>, %arg4: memref<8x128xf32, #tpu.memory_space<vmem>>, %arg5: memref<8x128xf32, #tpu.memory_space<vmem>>, %arg6: memref<8x128xf32, #tpu.memory_space<vmem>>, %arg7: memref<8x128xf32, #tpu.memory_space<vmem>>, %arg8: memref<2xf32, #tpu.memory_space<smem>>) attributes {dimension_semantics = [#tpu.dimension_semantics<parallel>, #tpu.dimension_semantics<arbitrary>], iteration_bounds = array<i64: 1, 1>, scalar_prefetch = 0 : i64, scratch_operands = 1 : i64, tpu.core_type = #tpu.core_type<tc>, window_params = [{transform_indices = @transform_0, window_bounds = array<i64: 2>}, {transform_indices = @transform_1, window_bounds = array<i64: 8, 128>}, {transform_indices = @transform_2, window_bounds = array<i64: 8, 128>}, {transform_indices = @transform_3, window_bounds = array<i64: 8, 128>}, {transform_indices = @transform_4, window_bounds = array<i64: 8, 128>}, {transform_indices = @transform_5, window_bounds = array<i64: 8, 128>}]} {
    %c0_i32 = arith.constant 0 : i32
    %0 = arith.cmpi eq, %arg1, %c0_i32 : i32
    %1 = arith.extui %0 : i1 to i32
    %c0_i32_0 = arith.constant 0 : i32
    %2 = arith.cmpi ne, %1, %c0_i32_0 : i32
    scf.if %2 {
      %cst_19 = arith.constant 0.000000e+00 : f32
      %c0_20 = arith.constant 0 : index
      %41 = memref.load %arg8[%c0_20] : memref<2xf32, #tpu.memory_space<smem>>
      memref.store %cst_19, %arg8[%c0_20] : memref<2xf32, #tpu.memory_space<smem>>
      %cst_21 = arith.constant 0.000000e+00 : f32
      %c1_22 = arith.constant 1 : index
      %42 = memref.load %arg8[%c1_22] : memref<2xf32, #tpu.memory_space<smem>>
      memref.store %cst_21, %arg8[%c1_22] : memref<2xf32, #tpu.memory_space<smem>>
    } else {
    }
    %c0 = arith.constant 0 : index
    %c0_1 = arith.constant 0 : index
    %3 = vector.load %arg3[%c0, %c0_1] : memref<8x128xf32, #tpu.memory_space<vmem>>, vector<8x128xf32>
    %c0_2 = arith.constant 0 : index
    %c0_3 = arith.constant 0 : index
    %4 = vector.load %arg4[%c0_2, %c0_3] : memref<8x128xf32, #tpu.memory_space<vmem>>, vector<8x128xf32>
    %cst = arith.constant 0.000000e+00 : f32
    %cst_4 = arith.constant 1.000000e+00 : f32
    %5 = vector.broadcast %cst : f32 to vector<8x128xf32>
    %6 = arith.maximumf %5, %3 : vector<8x128xf32>
    %7 = vector.broadcast %cst_4 : f32 to vector<8x128xf32>
    %8 = arith.minimumf %7, %6 : vector<8x128xf32>
    %9 = math.log %8 : vector<8x128xf32>
    %cst_5 = arith.constant -1.000000e+02 : f32
    %10 = vector.broadcast %cst_5 : f32 to vector<8x128xf32>
    %11 = arith.maximumf %9, %10 : vector<8x128xf32>
    %cst_6 = arith.constant 1.000000e+00 : f32
    %12 = vector.broadcast %cst_6 : f32 to vector<8x128xf32>
    %13 = arith.subf %12, %8 : vector<8x128xf32>
    %14 = math.log %13 : vector<8x128xf32>
    %cst_7 = arith.constant -1.000000e+02 : f32
    %15 = vector.broadcast %cst_7 : f32 to vector<8x128xf32>
    %16 = arith.maximumf %14, %15 : vector<8x128xf32>
    %17 = arith.subf %11, %16 : vector<8x128xf32>
    %18 = arith.mulf %4, %17 : vector<8x128xf32>
    %19 = arith.addf %16, %18 : vector<8x128xf32>
    %c0_8 = arith.constant 0 : index
    %c0_9 = arith.constant 0 : index
    %20 = vector.load %arg5[%c0_8, %c0_9] : memref<8x128xf32, #tpu.memory_space<vmem>>, vector<8x128xf32>
    %c0_10 = arith.constant 0 : index
    %c0_11 = arith.constant 0 : index
    %21 = vector.load %arg6[%c0_10, %c0_11] : memref<8x128xf32, #tpu.memory_space<vmem>>, vector<8x128xf32>
    %22 = arith.subf %20, %21 : vector<8x128xf32>
    %23 = arith.mulf %22, %22 : vector<8x128xf32>
    %c0_12 = arith.constant 0 : index
    %24 = memref.load %arg8[%c0_12] : memref<2xf32, #tpu.memory_space<smem>>
    %25 = vector.shape_cast %19 : vector<8x128xf32> to vector<1x8x128xf32>
    %cst_13 = arith.constant dense<0.000000e+00> : vector<1xf32>
    %26 = vector.multi_reduction <add>, %25, %cst_13 [1, 2] : vector<1x8x128xf32> to vector<1xf32>
    %27 = vector.shape_cast %26 : vector<1xf32> to vector<1x1x1xf32>
    %28 = vector.extract %27[0, 0, 0] : f32 from vector<1x1x1xf32>
    %29 = arith.addf %24, %28 : f32
    %c0_14 = arith.constant 0 : index
    %30 = memref.load %arg8[%c0_14] : memref<2xf32, #tpu.memory_space<smem>>
    memref.store %29, %arg8[%c0_14] : memref<2xf32, #tpu.memory_space<smem>>
    %c1 = arith.constant 1 : index
    %31 = memref.load %arg8[%c1] : memref<2xf32, #tpu.memory_space<smem>>
    %32 = vector.shape_cast %23 : vector<8x128xf32> to vector<1x8x128xf32>
    %cst_15 = arith.constant dense<0.000000e+00> : vector<1xf32>
    %33 = vector.multi_reduction <add>, %32, %cst_15 [1, 2] : vector<1x8x128xf32> to vector<1xf32>
    %34 = vector.shape_cast %33 : vector<1xf32> to vector<1x1x1xf32>
    %35 = vector.extract %34[0, 0, 0] : f32 from vector<1x1x1xf32>
    %36 = arith.addf %31, %35 : f32
    %c1_16 = arith.constant 1 : index
    %37 = memref.load %arg8[%c1_16] : memref<2xf32, #tpu.memory_space<smem>>
    memref.store %36, %arg8[%c1_16] : memref<2xf32, #tpu.memory_space<smem>>
    %c0_i32_17 = arith.constant 0 : i32
    %38 = arith.cmpi eq, %arg1, %c0_i32_17 : i32
    %39 = arith.extui %38 : i1 to i32
    %c0_i32_18 = arith.constant 0 : i32
    %40 = arith.cmpi ne, %39, %c0_i32_18 : i32
    scf.if %40 {
      %c0_19 = arith.constant 0 : index
      %41 = memref.load %arg8[%c0_19] : memref<2xf32, #tpu.memory_space<smem>>
      %cst_20 = arith.constant 0.000000e+00 : f32
      %42 = arith.subf %cst_20, %41 : f32
      %cst_21 = arith.constant 1.024000e+03 : f32
      %43 = arith.divf %42, %cst_21 : f32
      %c1_22 = arith.constant 1 : index
      %44 = memref.load %arg8[%c1_22] : memref<2xf32, #tpu.memory_space<smem>>
      %cst_23 = arith.constant 1.024000e+03 : f32
      %45 = arith.divf %44, %cst_23 : f32
      %c0_24 = arith.constant 0 : index
      %46 = memref.load %arg2[%c0_24] : memref<2xf32, #tpu.memory_space<smem>>
      %47 = arith.mulf %43, %46 : f32
      %c1_25 = arith.constant 1 : index
      %48 = memref.load %arg2[%c1_25] : memref<2xf32, #tpu.memory_space<smem>>
      %49 = arith.mulf %45, %48 : f32
      %50 = arith.addf %47, %49 : f32
      %cst_26 = arith.constant 0.000000e+00 : f32
      %51 = vector.broadcast %cst_26 : f32 to vector<8x128xf32>
      %52 = vector.broadcast %50 : f32 to vector<8x128xf32>
      %53 = arith.addf %51, %52 : vector<8x128xf32>
      %c0_27 = arith.constant 0 : index
      %c0_28 = arith.constant 0 : index
      %54 = vector.load %arg7[%c0_27, %c0_28] : memref<8x128xf32, #tpu.memory_space<vmem>>, vector<8x128xf32>
      tpu.vector_store %arg7[%c0_27, %c0_28], %53 {strides = array<i32>} : memref<8x128xf32, #tpu.memory_space<vmem>>, vector<8x128xf32>,
    } else {
    }
    return
  }
  func.func @transform_0(%arg0: i32, %arg1: i32) -> i32 {
    %c0_i32 = arith.constant 0 : i32
    %c0_i32_0 = arith.constant 0 : i32
    return %c0_i32 : i32
  }
  func.func @transform_1(%arg0: i32, %arg1: i32) -> (i32, i32) {
    %c1_i32 = arith.constant 1 : i32
    %0 = arith.muli %arg0, %c1_i32 : i32
    %1 = arith.addi %0, %arg1 : i32
    %c0_i32 = arith.constant 0 : i32
    %c0_i32_0 = arith.constant 0 : i32
    return %1, %c0_i32 : i32, i32
  }
  func.func @transform_2(%arg0: i32, %arg1: i32) -> (i32, i32) {
    %c1_i32 = arith.constant 1 : i32
    %0 = arith.muli %arg0, %c1_i32 : i32
    %1 = arith.addi %0, %arg1 : i32
    %c0_i32 = arith.constant 0 : i32
    %c0_i32_0 = arith.constant 0 : i32
    return %1, %c0_i32 : i32, i32
  }
  func.func @transform_3(%arg0: i32, %arg1: i32) -> (i32, i32) {
    %c1_i32 = arith.constant 1 : i32
    %0 = arith.muli %arg0, %c1_i32 : i32
    %1 = arith.addi %0, %arg1 : i32
    %c0_i32 = arith.constant 0 : i32
    %c0_i32_0 = arith.constant 0 : i32
    return %1, %c0_i32 : i32, i32
  }
  func.func @transform_4(%arg0: i32, %arg1: i32) -> (i32, i32) {
    %c1_i32 = arith.constant 1 : i32
    %0 = arith.muli %arg0, %c1_i32 : i32
    %1 = arith.addi %0, %arg1 : i32
    %c0_i32 = arith.constant 0 : i32
    %c0_i32_0 = arith.constant 0 : i32
    return %1, %c0_i32 : i32, i32
  }
  func.func @transform_5(%arg0: i32, %arg1: i32) -> (i32, i32) {
    %c0_i32 = arith.constant 0 : i32
    %c0_i32_0 = arith.constant 0 : i32
    return %arg0, %c0_i32 : i32, i32
  }
}

</mosaic_0001>

<llo_original>
// kernel: tpu_custom_call.1
$region0: #{tpu_custom_call.1}
  #allocation0 [shape = 'u32[]', space=smem, size = 0x4, offset = 0x4, fixed_abs, tag = 'smem constant byte address 0x4 - core index']
  #allocation1 [shape = 'u32[144,128]{1,0:T(1,128)}', space=vmem, size = 0x12000, scoped, tag = 'internal scratch']
  #allocation2 [shape = 'f32[2]{0:T(128)}', space=smem, size = 0x200, scoped, tag = 'scratch operand']
  %s0 = inlined_call_operand.hbm [shape: f32[2], index: 0, kind: input, shape index: {}]
  %s1 = inlined_call_operand.hbm [shape: f32[8,128], index: 1, kind: input, shape index: {}]
  %s2 = inlined_call_operand.hbm [shape: f32[8,128], index: 2, kind: input, shape index: {}]
  %s3 = inlined_call_operand.vmem [shape: f32[8,128], index: 3, kind: input, shape index: {}]
  %s4 = inlined_call_operand.hbm [shape: f32[8,128], index: 4, kind: input, shape index: {}]
  %s5 = inlined_call_operand.hbm [shape: f32[8,128], index: 5, kind: output, shape index: {}]
  %s6 = sld [smem:[#allocation0]]
  $region54: #{tpu_custom_call.1} parent=0
    _
  %s8 = ssub.s32 1, %s6
  %s9 = scalar_select 0, %s8, %s6
  $region1: #{tpu_custom_call.1} parent=0
    #allocation3 [shape = 'u8[512]{0}', space=smem, size = 0x200, scoped, tag = 'input window, operand 0, single buffered']
    #allocation4 [shape = 's32[1]{0}', space=sflag, size = 0x4, scoped, tag = 'scoped memory for tpu_custom_call.1']
    #allocation5 [shape = 's32[1]{0}', space=sflag, size = 0x4, scoped, tag = 'scoped memory for tpu_custom_call.1']
    #allocation6 [shape = 's32[1]{0}', space=sflag, size = 0x4, scoped, tag = 'scoped memory for tpu_custom_call.1']
    #allocation7 [shape = 'u8[4096]{0}', space=vmem, size = 0x1000, scoped, tag = 'input window, operand 1, single buffered']
    #allocation8 [shape = 'u8[4096]{0}', space=vmem, size = 0x1000, scoped, tag = 'input window, operand 2, single buffered']
    #allocation9 [shape = 's32[1]{0}', space=sflag, size = 0x4, scoped, tag = 'scoped memory for tpu_custom_call.1']
    #allocation10 [shape = 'u8[4096]{0}', space=vmem, size = 0x1000, scoped, tag = 'input window, operand 4, single buffered']
    #allocation11 [shape = 'u8[4096]{0}', space=vmem, size = 0x1000, scoped, tag = 'output window, operand 0, single buffered']
    %10 = vsyncpa [#allocation6], 0
    %11 = vsyncpa [#allocation4], 0
    %12 = vsyncpa [#allocation9], 0
    %13 = vsyncpa [#allocation5], 0
    // Predicated region
    $region2: #{tpu_custom_call.1} parent=1 // pred_check
      _
    $region3: #{tpu_custom_call.1} parent=1 // pred_check_branch
      %15 = sbr.rel (0) target = $region5
    $region4: #{tpu_custom_call.1} parent=1 // pred_region
      %s17 = ssub.s32 16, 16
      %18 = vsyncadd [#allocation6], %s17
      %21 = dma.hbm_to_smem %s0, 16, [#allocation3], [#allocation6]
    $region5: #{tpu_custom_call.1} parent=1 // pred_fallthru
      _
    // Predicated region
    $region6: #{tpu_custom_call.1} parent=1 // pred_check
      _
    $region7: #{tpu_custom_call.1} parent=1 // pred_check_branch
      %23 = sbr.rel (0) target = $region9
    $region8: #{tpu_custom_call.1} parent=1 // pred_region
      %s24 = sadd.s32 0, 0
      %s26 = ssub.s32 128, 128
      %27 = vsyncadd [#allocation4], %s26
      %s28 = smul.addr %s24, 128
      %s29 = scalar_lea.hbm %s1, %s28
      %s31 = sshll.u32 [#allocation7], 4
      %s32 = int_to_ptr.vmem [resolvable:$true] %s31
      %34 = dma.hbm_to_vmem [thread:$0]  %s29, 128, %s32, [#allocation4]
    $region9: #{tpu_custom_call.1} parent=1 // pred_fallthru
      _
    // Predicated region
    $region10: #{tpu_custom_call.1} parent=1 // pred_check
      _
    $region11: #{tpu_custom_call.1} parent=1 // pred_check_branch
      %36 = sbr.rel (0) target = $region13
    $region12: #{tpu_custom_call.1} parent=1 // pred_region
      %s37 = sadd.s32 0, 0
      %s39 = ssub.s32 128, 128
      %40 = vsyncadd [#allocation9], %s39
      %s41 = smul.addr %s37, 128
      %s42 = scalar_lea.hbm %s2, %s41
      %s44 = sshll.u32 [#allocation8], 4
      %s45 = int_to_ptr.vmem [resolvable:$true] %s44
      %47 = dma.hbm_to_vmem [thread:$0]  %s42, 128, %s45, [#allocation9]
    $region13: #{tpu_custom_call.1} parent=1 // pred_fallthru
      _
    // Predicated region
    $region14: #{tpu_custom_call.1} parent=1 // pred_check
      _
    $region15: #{tpu_custom_call.1} parent=1 // pred_check_branch
      %49 = sbr.rel (0) target = $region17
    $region16: #{tpu_custom_call.1} parent=1 // pred_region
      %s50 = sadd.s32 0, 0
      %p51 = scmp.lt.s32.totalorder %s50, 0
      %s52 = scalar_select %p51, %s50, 0
      %s53 = smul.addr %s52, 8
      %s54 = scalar_lea.vmem %s3, %s53
      %s55 = sadd.s32 0, 0
    $region17: #{tpu_custom_call.1} parent=1 // pred_fallthru
      _
    // Predicated region
    $region18: #{tpu_custom_call.1} parent=1 // pred_check
      _
    $region19: #{tpu_custom_call.1} parent=1 // pred_check_branch
      %57 = sbr.rel (0) target = $region21
    $region20: #{tpu_custom_call.1} parent=1 // pred_region
      %s58 = sadd.s32 0, 0
      %s60 = ssub.s32 128, 128
      %61 = vsyncadd [#allocation9], %s60
      %s62 = smul.addr %s58, 128
      %s63 = scalar_lea.hbm %s4, %s62
      %s65 = sshll.u32 [#allocation10], 4
      %s66 = int_to_ptr.vmem [resolvable:$true] %s65
      %68 = dma.hbm_to_vmem [thread:$0]  %s63, 128, %s66, [#allocation9]
    $region21: #{tpu_custom_call.1} parent=1 // pred_fallthru
      _
    // Predicated region
    $region22: #{tpu_custom_call.1} parent=1 // pred_check
      _
    $region23: #{tpu_custom_call.1} parent=1 // pred_check_branch
      %70 = sbr.rel (0) target = $region25
    $region24: #{tpu_custom_call.1} parent=1 // pred_region
      %71 = dma.done [#allocation6], 16
    $region25: #{tpu_custom_call.1} parent=1 // pred_fallthru
      _
    // Predicated region
    $region26: #{tpu_custom_call.1} parent=1 // pred_check
      _
    $region27: #{tpu_custom_call.1} parent=1 // pred_check_branch
      %73 = sbr.rel (0) target = $region29
    $region28: #{tpu_custom_call.1} parent=1 // pred_region
      %74 = dma.done [#allocation4], 128
    $region29: #{tpu_custom_call.1} parent=1 // pred_fallthru
      _
    // Predicated region
    $region30: #{tpu_custom_call.1} parent=1 // pred_check
      _
    $region31: #{tpu_custom_call.1} parent=1 // pred_check_branch
      %76 = sbr.rel (0) target = $region33
    $region32: #{tpu_custom_call.1} parent=1 // pred_region
      %77 = dma.done [#allocation9], 128
    $region33: #{tpu_custom_call.1} parent=1 // pred_fallthru
      _
    // Predicated region
    $region34: #{tpu_custom_call.1} parent=1 // pred_check
      _
    $region35: #{tpu_custom_call.1} parent=1 // pred_check_branch
      %79 = sbr.rel (0) target = $region37
    $region36: #{tpu_custom_call.1} parent=1 // pred_region
      %80 = dma.done [#allocation9], 128
    $region37: #{tpu_custom_call.1} parent=1 // pred_fallthru
      _
    %81 = sfence
    %s82 = sadd.s32 0, 0
    %p83 = scmp.lt.s32.totalorder %s82, 0
    %s84 = scalar_select %p83, %s82, 0
    %s85 = smul.addr %s84, 8
    %s86 = scalar_lea.vmem %s3, %s85
    %s87 = sadd.s32 0, 0
    %s88 = sadd.s32 0, 0
    %s89 = sadd.s32 0, 0
    %p90 = scmp.lt.s32.totalorder %s89, 0
    %s91 = scalar_select %p90, %s89, 0
    %s92 = smul.addr %s91, 8
    %s93 = scalar_lea.vmem %s3, %s92
    %s94 = sadd.s32 0, 0
    %s95 = sadd.s32 0, 0
    %p96 = scmp.eq.s32.totalorder 0, 0
    // Predicated region
    $region38: #{tpu_custom_call.1} parent=1 // pred_check
      %p97 = pneg %p96
    $region39: #{tpu_custom_call.1} parent=1 // pred_check_branch
      %99 = sbr.rel (%p97) target = $region41
    $region40: #{tpu_custom_call.1} parent=1 // pred_region
      %s100 = scalar_lea.smem [#allocation2], 0
      %101 = sst [smem:[%s100]] 0.0
      %s102 = scalar_lea.smem [#allocation2], 1
      %103 = sst [smem:[%s102]] 0.0
    $region41: #{tpu_custom_call.1} parent=1 // pred_fallthru
      _
    %v104 = vld [vmem:[#allocation7] sm:$0xff]
    %v105 = vld [vmem:[#allocation8] sm:$0xff]
    %v106 = vmax.f32 %v104, 0.0
    %v107 = vmin.f32 %v106, 1.0
    %v108 = vlog2.pop %v107
    %v109 = vmul.f32 %v108, 0.6931472
    %v110 = vmax.f32 %v109, -100.0
    %v111 = vsub.f32 1.0, %v107
    %v112 = vlog2.pop %v111
    %v113 = vmul.f32 %v112, 0.6931472
    %v114 = vmax.f32 %v113, -100.0
    %v115 = vsub.f32 %v110, %v114
    %v116 = vmul.f32 %v105, %v115
    %v117 = vadd.f32 %v114, %v116
    %v118 = vld [vmem:[%s93] sm:$0xff]
    %v119 = vld [vmem:[#allocation10] sm:$0xff]
    %v120 = vsub.f32 %v118, %v119
    %v121 = vmul.f32 %v120, %v120
    %s122 = sld [smem:[#allocation2]]
    %123 = vadd.xlane.f32.xlu0 %v117
    %v124 = vpop.xlane.xlu0 %123
    %v125 = vrot.slane %v124, 4
    %v126 = vadd.f32 %v124, %v125
    %v127 = vrot.slane %v126, 2
    %v128 = vadd.f32 %v126, %v127
    %v129 = vrot.slane %v128, 1
    %v130 = vadd.f32 %v128, %v129
    %s131 = vtos %v130
    %s132 = sadd.f32 %s122, %s131
    %s133 = scalar_lea.smem [#allocation2], 0
    %134 = sst [smem:[%s133]] %s132
    %s135 = sld [smem:[#allocation2 + $0x1]]
    %136 = vadd.xlane.f32.xlu0 %v121
    %v137 = vpop.xlane.xlu0 %136
    %v138 = vrot.slane %v137, 4
    %v139 = vadd.f32 %v137, %v138
    %v140 = vrot.slane %v139, 2
    %v141 = vadd.f32 %v139, %v140
    %v142 = vrot.slane %v141, 1
    %v143 = vadd.f32 %v141, %v142
    %s144 = vtos %v143
    %s145 = sadd.f32 %s135, %s144
    %s146 = scalar_lea.smem [#allocation2], 1
    %147 = sst [smem:[%s146]] %s145
    // Predicated region
    $region42: #{tpu_custom_call.1} parent=1 // pred_check
      %p148 = pneg %p96
    $region43: #{tpu_custom_call.1} parent=1 // pred_check_branch
      %150 = sbr.rel (%p148) target = $region45
    $region44: #{tpu_custom_call.1} parent=1 // pred_region
      %s151 = sld [smem:[#allocation2]]
      %s152 = ssub.f32 0.0, %s151
      %v153 = vrcp.pop 1024.0
      %s154 = vtos %v153
      %s155 = smul.f32 %s152, %s154
      %s156 = sld [smem:[#allocation2 + $0x1]]
      %v157 = vrcp.pop 1024.0
      %s158 = vtos %v157
      %s159 = smul.f32 %s156, %s158
      %s160 = sld [smem:[#allocation3]]
      %s161 = smul.f32 %s155, %s160
      %s162 = sld [smem:[#allocation3 + $0x1]]
      %s163 = smul.f32 %s159, %s162
      %s164 = sadd.f32 %s161, %s163
      %v165 = vstv %s164
      %v166 = vadd.f32 %v165, 0.0
      %167 = vst [vmem:[#allocation11] sm:$0xff] %v166
    $region45: #{tpu_custom_call.1} parent=1 // pred_fallthru
      _
    // Predicated region
    $region46: #{tpu_custom_call.1} parent=1 // pred_check
      _
    $region47: #{tpu_custom_call.1} parent=1 // pred_check_branch
      %169 = sbr.rel (0) target = $region49
    $region48: #{tpu_custom_call.1} parent=1 // pred_region
      %s171 = ssub.s32 128, 128
      %172 = vsyncadd [#allocation5], %s171
      %s174 = sshll.u32 [#allocation11], 4
      %s175 = int_to_ptr.vmem [resolvable:$true] %s174
      %177 = dma.vmem_to_hbm [thread:$0]  %s175, 128, %s5, [#allocation5]
    $region49: #{tpu_custom_call.1} parent=1 // pred_fallthru
      _
    // Predicated region
    $region50: #{tpu_custom_call.1} parent=1 // pred_check
      _
    $region51: #{tpu_custom_call.1} parent=1 // pred_check_branch
      %179 = sbr.rel (0) target = $region53
    $region52: #{tpu_custom_call.1} parent=1 // pred_region
      %180 = dma.done [#allocation5], 128
    $region53: #{tpu_custom_call.1} parent=1 // pred_fallthru
      _
    %181 = vsyncpa [#allocation4], 1
    %182 = vsyncpa [#allocation9], 1
    %183 = vsyncpa [#allocation5], 1
    %184 = vsyncpa [#allocation6], 1

</llo_original>
